<compile_context>
chip_gen: v7x
topology: tpu7x:2x2x1
jax: 0.10.0
libtpu: 0.0.40
codegen_flags: <defaults>
</compile_context>

<pallas_src>
import functools
import math

import jax
import jax.numpy as jnp
import numpy as np
from jax.experimental import pallas as pl
from jax.experimental.pallas import tpu as pltpu


def _round_up(x: int, m: int) -> int:
    return (x + m - 1) // m * m


def make_gaussian_weights(channels: int, kernel_size: int, sigma: float, conv_dim: int = 2):
    """Deterministic init mirroring GaussianSmoothing.__init__ (2-D path).

    Returns (wv, wh, full):
      wv, wh : normalized separable 1-D Gaussian factors, shape (K,) float32
      full   : (C, 1, K, K) depthwise weight identical to the module buffer
               (used only for the reference check; outer(wv, wh) == full[0, 0]).
    """
    assert conv_dim == 2, "only the 2-D (F.conv2d) path is implemented"
    ks = [kernel_size] * conv_dim
    sg = [sigma] * conv_dim

    factors = []
    for size, std in zip(ks, sg):
        g = np.arange(size, dtype=np.float32)
        mean = (size - 1) / 2.0
        g = (1.0 / (std * math.sqrt(2.0 * math.pi))
             * np.exp(-(((g - mean) / std) ** 2) / 2.0))
        factors.append(g.astype(np.float32))

    # Full kernel built exactly as the PyTorch module does.
    grids = np.meshgrid(*[np.arange(s, dtype=np.float32) for s in ks], indexing="ij")
    full = np.ones([], dtype=np.float32)
    for size, std, mg in zip(ks, sg, grids):
        mean = (size - 1) / 2.0
        full = full * (1.0 / (std * math.sqrt(2.0 * math.pi))
                       * np.exp(-(((mg - mean) / std) ** 2) / 2.0))
    full = full / np.sum(full)
    full = np.tile(full.reshape(1, 1, *full.shape), (channels, 1) + (1,) * conv_dim)

    wv = factors[0] / factors[0].sum()
    wh = factors[1] / factors[1].sum()
    return wv.astype(np.float32), wh.astype(np.float32), full.astype(np.float32)


def _gauss_sep_kernel(x_ref, o_ref, tmp_ref, *, wv, wh, K: int, OH: int, OW: int):
    """Separable depthwise Gaussian on a block of whole image planes.

    x_ref   : (PB, H, W)  input block (VMEM), H/W are the full plane extents.
    o_ref   : (PB, OH, OW) output block (VMEM), full output extents (masked
              lane-tail stores are generated automatically if OW % 128 != 0).
    tmp_ref : (PB, OH, W) f32 VMEM scratch holding the row-blurred planes.
    wv, wh  : K Python float taps baked into the kernel (no SMEM traffic).
    """
    # Vertical pass: K sublane-shifted reads straight from the input ref,
    # accumulated in f32, written once to the scratch ref.
    acc = x_ref[:, 0:OH, :].astype(jnp.float32) * wv[0]
    for u in range(1, K):
        acc = acc + x_ref[:, u:u + OH, :].astype(jnp.float32) * wv[u]
    tmp_ref[...] = acc

    # Horizontal pass: K lane-shifted *loads* of the scratch ref (static
    # slices of a Ref, not K materialized copies of a traced value).
    out = tmp_ref[:, :, 0:OW] * wh[0]
    for v in range(1, K):
        out = out + tmp_ref[:, :, v:v + OW] * wh[v]

    o_ref[...] = out.astype(o_ref.dtype)


def _per_plane_vmem_bytes(H: int, W: int, OH: int, OW: int, itemsize: int) -> int:
    """VMEM bytes one plane costs per grid step, including tile padding,
    2x double-buffering of the input/output blocks and the f32 scratch."""
    sub = max(8, 32 // itemsize)            # f32 -> 8, bf16 -> 16, int8 -> 32
    in_b = _round_up(H, sub) * _round_up(W, 128) * itemsize
    out_b = _round_up(OH, sub) * _round_up(OW, 128) * itemsize
    tmp_b = _round_up(OH, 8) * _round_up(W, 128) * 4       # f32 scratch
    return 2 * in_b + 2 * out_b + tmp_b


def _choose_plane_block(num_planes: int, per_plane_bytes: int,
                        budget_bytes: int = 24 * 1024 * 1024) -> int:
    """Largest divisor of num_planes that fits the VMEM budget, preferring an
    EVEN number of grid steps (clean megacore split on v7x) and >= 2 steps
    (so DMA of step i+1 overlaps compute of step i)."""
    divisors = [d for d in range(1, num_planes + 1) if num_planes % d == 0]

    def ok(d: int, require_even: bool, require_multi: bool) -> bool:
        if d * per_plane_bytes > budget_bytes:
            return False
        steps = num_planes // d
        if require_multi and num_planes > 1 and steps < 2:
            return False
        if require_even and steps % 2 != 0:
            return False
        return True

    for require_even, require_multi in ((True, True), (False, True), (False, False)):
        cands = [d for d in divisors if ok(d, require_even, require_multi)]
        if cands:
            return max(cands)
    # Even a single plane exceeds the budget.
    # TODO(synk): H-strip tiling with a K-1 row halo for this case.
    return 1


def gaussian_smoothing(x: jax.Array, weight_v, weight_h) -> jax.Array:
    """Depthwise valid 2-D convolution with a separable Gaussian kernel.

    x: (N, C, H, W)  ->  (N, C, H-K+1, W-K+1)   (matches F.conv2d(groups=C)).
    weight_v / weight_h: length-K separable taps (numpy / sequence of floats);
    they are baked into the kernel as constants.
    """
    wv = tuple(float(v) for v in np.asarray(weight_v, dtype=np.float32))
    wh = tuple(float(v) for v in np.asarray(weight_h, dtype=np.float32))
    K = len(wv)
    assert len(wh) == K

    N, C, H, W = x.shape
    OH, OW = H - K + 1, W - K + 1
    P = N * C

    # Contiguous leading-dim reshape: no HBM copy.
    xp = x.reshape(P, H, W)

    itemsize = xp.dtype.itemsize
    per_plane = _per_plane_vmem_bytes(H, W, OH, OW, itemsize)
    PB = _choose_plane_block(P, per_plane)
    grid = (P // PB,)

    # Scoped-VMEM limit: cover the chosen block (plus headroom), stay well
    # under v7x's 64 MiB physical VMEM (v5e/v6e have 128 MiB).
    vmem_limit = min(48 * 1024 * 1024,
                     max(32 * 1024 * 1024, PB * per_plane + 8 * 1024 * 1024))

    kernel = functools.partial(_gauss_sep_kernel, wv=wv, wh=wh, K=K, OH=OH, OW=OW)

    out = pl.pallas_call(
        kernel,
        out_shape=jax.ShapeDtypeStruct((P, OH, OW), x.dtype),
        grid_spec=pltpu.PrefetchScalarGridSpec(
            num_scalar_prefetch=0,
            grid=grid,
            in_specs=[
                # A block of PB whole planes; last two dims == full array dims,
                # so no (8,128) padding and no extra HBM pad pass.
                pl.BlockSpec((PB, H, W), lambda i: (i, 0, 0)),
            ],
            out_specs=pl.BlockSpec((PB, OH, OW), lambda i: (i, 0, 0)),
            scratch_shapes=[pltpu.VMEM((PB, OH, W), jnp.float32)],
        ),
        compiler_params=pltpu.CompilerParams(
            dimension_semantics=("parallel",),
            vmem_limit_bytes=vmem_limit),
    )(xp)

    return out.reshape(N, C, OH, OW)


if __name__ == "__main__":
    channels, kernel_size, sigma, conv_dim = 4, 3, 1.0, 2
    N, H, W = 2, 16, 16

    key = jax.random.PRNGKey(0)
    x = jax.random.normal(key, (N, channels, H, W), dtype=jnp.float32)
    wv, wh, w_full = make_gaussian_weights(channels, kernel_size, sigma, conv_dim)

    out = gaussian_smoothing(x, wv, wh)
    out = jax.block_until_ready(out)

    # Reference: XLA depthwise conv (same semantics as F.conv2d(groups=C)).
    ref = jax.lax.conv_general_dilated(
        x, jnp.asarray(w_full), window_strides=(1, 1), padding="VALID",
        dimension_numbers=("NCHW", "OIHW", "NCHW"),
        feature_group_count=channels)
    ref = jax.block_until_ready(ref)

    assert out.shape == (N, channels, H - kernel_size + 1, W - kernel_size + 1)
    np.testing.assert_allclose(np.asarray(out), np.asarray(ref), rtol=1e-5, atol=1e-5)

    print("KERNEL_OK")
</pallas_src>

<mosaic_0001>
module attributes {stable_mosaic.version = 11 : i64} {
  func.func @_gauss_sep_kernel(%arg0: i32, %arg1: memref<4x16x16xf32, #tpu.memory_space<vmem>>, %arg2: memref<4x14x14xf32, #tpu.memory_space<vmem>>, %arg3: memref<4x14x16xf32, #tpu.memory_space<vmem>>) attributes {dimension_semantics = [#tpu.dimension_semantics<parallel>], iteration_bounds = array<i64: 2>, scalar_prefetch = 0 : i64, scratch_operands = 1 : i64, tpu.core_type = #tpu.core_type<tc>, window_params = [{transform_indices = @transform_0, window_bounds = array<i64: 4, 16, 16>}, {transform_indices = @transform_1, window_bounds = array<i64: 4, 14, 14>}]} {
    %c0 = arith.constant 0 : index
    %c0_0 = arith.constant 0 : index
    %c0_1 = arith.constant 0 : index
    %0 = vector.load %arg1[%c0, %c0_0, %c0_1] : memref<4x16x16xf32, #tpu.memory_space<vmem>>, vector<4x14x16xf32>
    %cst = arith.constant 0.274068624 : f32
    %1 = vector.broadcast %cst : f32 to vector<4x14x16xf32>
    %2 = arith.mulf %0, %1 : vector<4x14x16xf32>
    %c0_2 = arith.constant 0 : index
    %c1 = arith.constant 1 : index
    %c0_3 = arith.constant 0 : index
    %3 = vector.load %arg1[%c0_2, %c1, %c0_3] : memref<4x16x16xf32, #tpu.memory_space<vmem>>, vector<4x14x16xf32>
    %cst_4 = arith.constant 0.451862782 : f32
    %4 = vector.broadcast %cst_4 : f32 to vector<4x14x16xf32>
    %5 = arith.mulf %3, %4 : vector<4x14x16xf32>
    %6 = arith.addf %2, %5 : vector<4x14x16xf32>
    %c0_5 = arith.constant 0 : index
    %c2 = arith.constant 2 : index
    %c0_6 = arith.constant 0 : index
    %7 = vector.load %arg1[%c0_5, %c2, %c0_6] : memref<4x16x16xf32, #tpu.memory_space<vmem>>, vector<4x14x16xf32>
    %cst_7 = arith.constant 0.274068624 : f32
    %8 = vector.broadcast %cst_7 : f32 to vector<4x14x16xf32>
    %9 = arith.mulf %7, %8 : vector<4x14x16xf32>
    %10 = arith.addf %6, %9 : vector<4x14x16xf32>
    %c0_8 = arith.constant 0 : index
    %c0_9 = arith.constant 0 : index
    %c0_10 = arith.constant 0 : index
    %11 = vector.load %arg3[%c0_8, %c0_9, %c0_10] : memref<4x14x16xf32, #tpu.memory_space<vmem>>, vector<4x14x16xf32>
    tpu.vector_store %arg3[%c0_8, %c0_9, %c0_10], %10 {strides = array<i32>} : memref<4x14x16xf32, #tpu.memory_space<vmem>>, vector<4x14x16xf32>,
    %c0_11 = arith.constant 0 : index
    %c0_12 = arith.constant 0 : index
    %c0_13 = arith.constant 0 : index
    %12 = vector.load %arg3[%c0_11, %c0_12, %c0_13] : memref<4x14x16xf32, #tpu.memory_space<vmem>>, vector<4x14x14xf32>
    %cst_14 = arith.constant 0.274068624 : f32
    %13 = vector.broadcast %cst_14 : f32 to vector<4x14x14xf32>
    %14 = arith.mulf %12, %13 : vector<4x14x14xf32>
    %c0_15 = arith.constant 0 : index
    %c0_16 = arith.constant 0 : index
    %c1_17 = arith.constant 1 : index
    %15 = vector.load %arg3[%c0_15, %c0_16, %c1_17] : memref<4x14x16xf32, #tpu.memory_space<vmem>>, vector<4x14x14xf32>
    %cst_18 = arith.constant 0.451862782 : f32
    %16 = vector.broadcast %cst_18 : f32 to vector<4x14x14xf32>
    %17 = arith.mulf %15, %16 : vector<4x14x14xf32>
    %18 = arith.addf %14, %17 : vector<4x14x14xf32>
    %c0_19 = arith.constant 0 : index
    %c0_20 = arith.constant 0 : index
    %c2_21 = arith.constant 2 : index
    %19 = vector.load %arg3[%c0_19, %c0_20, %c2_21] : memref<4x14x16xf32, #tpu.memory_space<vmem>>, vector<4x14x14xf32>
    %cst_22 = arith.constant 0.274068624 : f32
    %20 = vector.broadcast %cst_22 : f32 to vector<4x14x14xf32>
    %21 = arith.mulf %19, %20 : vector<4x14x14xf32>
    %22 = arith.addf %18, %21 : vector<4x14x14xf32>
    %c0_23 = arith.constant 0 : index
    %c0_24 = arith.constant 0 : index
    %c0_25 = arith.constant 0 : index
    %23 = vector.load %arg2[%c0_23, %c0_24, %c0_25] : memref<4x14x14xf32, #tpu.memory_space<vmem>>, vector<4x14x14xf32>
    tpu.vector_store %arg2[%c0_23, %c0_24, %c0_25], %22 {strides = array<i32>} : memref<4x14x14xf32, #tpu.memory_space<vmem>>, vector<4x14x14xf32>,
    return
  }
  func.func @transform_0(%arg0: i32) -> (i32, i32, i32) {
    %c0_i32 = arith.constant 0 : i32
    %c0_i32_0 = arith.constant 0 : i32
    %c0_i32_1 = arith.constant 0 : i32
    return %arg0, %c0_i32, %c0_i32_0 : i32, i32, i32
  }
  func.func @transform_1(%arg0: i32) -> (i32, i32, i32) {
    %c0_i32 = arith.constant 0 : i32
    %c0_i32_0 = arith.constant 0 : i32
    %c0_i32_1 = arith.constant 0 : i32
    return %arg0, %c0_i32, %c0_i32_0 : i32, i32, i32
  }
}

</mosaic_0001>

<llo_original>
// kernel: tpu_custom_call.1
$region0: #{tpu_custom_call.1}
  #allocation0 [shape = 'u32[]', space=smem, size = 0x4, offset = 0x4, fixed_abs, tag = 'smem constant byte address 0x4 - core index']
  #allocation1 [shape = 'u32[144,128]{1,0:T(1,128)}', space=vmem, size = 0x12000, scoped, tag = 'internal scratch']
  #allocation2 [shape = 'f32[4,14,16]{2,1,0:T(8,128)}', space=vmem, size = 0x8000, scoped, tag = 'scratch operand']
  %s0 = inlined_call_operand.hbm [shape: f32[8,16,16], index: 0, kind: input, shape index: {}]
  %s1 = inlined_call_operand.vmem [shape: f32[8,14,14], index: 1, kind: output, shape index: {}]
  %s2 = sld [smem:[#allocation0]]
  $region41: #{tpu_custom_call.1} parent=0
    _
  %s4 = ssub.s32 1, %s2
  %s5 = scalar_select 0, %s4, %s2
  $region1: #{tpu_custom_call.1} parent=0
    #allocation3 [shape = 'u8[65536]{0}', space=vmem, size = 0x10000, scoped, tag = 'input window, operand 0']
    #allocation4 [shape = 's32[2]{0}', space=sflag, size = 0x8, scoped, tag = 'scoped memory for tpu_custom_call.1']
    %6 = vsyncpa [#allocation4], 0
    %s7 = scalar_lea.sflag [#allocation4], 1
    %8 = vsyncpa %s7, 0
    loop: start=0, step=1, limit=4
    $region2: #{tpu_custom_call.1} parent=1 // loop_pre_header
      _
    $region3: #{tpu_custom_call.1} parent=1 // loop_header
      %s10 = sphi 0, %s14
      %p11 = scmp.ge.s32.totalorder %s10, 4
      %s20 = sphi 0, %s22
      %s23 = sphi 0, %s20
      %s24 = sphi 0, %s23
      %s40 = sphi 0, %s24
      %s46 = sphi 0, %s48
      %s49 = sphi 0, %s46
      %s50 = sphi 0, %s49
      %s66 = sphi 0, %s50
    $region4: #{tpu_custom_call.1} parent=1 // loop_header_branch
      %13 = sbr.rel (%p11) target = $region8
    $region5: #{tpu_custom_call.1} parent=1 // loop_body
      %s15 = ssub.s32 %s10, 1
      %s16 = ssub.s32 %s10, 2
      %s17 = sadd.s32 %s10, 1
      %s18 = ssub.s32 %s10, %s17
      %p19 = scmp.eq.s32.totalorder %s18, 0
      %s21 = sadd.s32 %s20, 1
      %s22 = scalar_select %p19, %s20, %s21
      %p25 = pneg %p19
      %p26 = scmp.eq.s32.totalorder %s10, 1
      %p27 = por %p25, %p26
      %p28 = scmp.ne.s32.totalorder %s20, %s23
      %p29 = scmp.eq.s32.totalorder %s10, 0
      %p30 = por %p28, %p29
      %p31 = scmp.ne.s32.totalorder %s20, %s23
      %p32 = scmp.eq.s32.totalorder %s15, 1
      %p33 = por %p31, %p32
      %p34 = scmp.ne.s32.totalorder %s23, %s24
      %p35 = scmp.eq.s32.totalorder %s15, 0
      %p36 = por %p34, %p35
      %p37 = scmp.ne.s32.totalorder %s23, %s24
      %p38 = scmp.eq.s32.totalorder %s16, 1
      %p39 = por %p37, %p38
      %p41 = scmp.ne.s32.totalorder %s24, %s40
      %p42 = scmp.eq.s32.totalorder %s16, 0
      %p43 = por %p41, %p42
      %s44 = ssub.s32 %s10, %s17
      %p45 = scmp.eq.s32.totalorder %s44, 0
      %s47 = sadd.s32 %s46, 1
      %s48 = scalar_select %p45, %s46, %s47
      %p51 = pneg %p45
      %p52 = scmp.eq.s32.totalorder %s10, 1
      %p53 = por %p51, %p52
      %p54 = scmp.ne.s32.totalorder %s46, %s49
      %p55 = scmp.eq.s32.totalorder %s10, 0
      %p56 = por %p54, %p55
      %p57 = scmp.ne.s32.totalorder %s46, %s49
      %p58 = scmp.eq.s32.totalorder %s15, 1
      %p59 = por %p57, %p58
      %p60 = scmp.ne.s32.totalorder %s49, %s50
      %p61 = scmp.eq.s32.totalorder %s15, 0
      %p62 = por %p60, %p61
      %p63 = scmp.ne.s32.totalorder %s49, %s50
      %p64 = scmp.eq.s32.totalorder %s16, 1
      %p65 = por %p63, %p64
      %p67 = scmp.ne.s32.totalorder %s50, %s66
      %p68 = scmp.eq.s32.totalorder %s16, 0
      %p69 = por %p67, %p68
      %p70 = scmp.le.s32.totalorder 1, %s10
      %p71 = scmp.lt.s32.totalorder %s10, 3
      %p72 = pnand %p70, %p71
      %p73 = pneg %p72
      // Predicated region
      $region9: #{tpu_custom_call.1} parent=5 // pred_check
        _
      $region10: #{tpu_custom_call.1} parent=5 // pred_check_branch
        %75 = sbr.rel (%p72) target = $region12
      $region11: #{tpu_custom_call.1} parent=5 // pred_region
        %s76 = ssub.s32 %s10, 1
      $region12: #{tpu_custom_call.1} parent=5 // pred_fallthru
        _
      %p77 = scmp.lt.s32.totalorder %s10, 2
      // Predicated region
      $region13: #{tpu_custom_call.1} parent=5 // pred_check
        %p78 = pneg %p77
      $region14: #{tpu_custom_call.1} parent=5 // pred_check_branch
        %80 = sbr.rel (%p78) target = $region16
      $region15: #{tpu_custom_call.1} parent=5 // pred_region
        // Predicated region
        $region17: #{tpu_custom_call.1} parent=15 // pred_check
          %p81 = pneg %p30
        $region18: #{tpu_custom_call.1} parent=15 // pred_check_branch
          %83 = sbr.rel (%p81) target = $region20
        $region19: #{tpu_custom_call.1} parent=15 // pred_region
          %s84 = sand.u32 %s20, 1
          %s85 = scalar_lea.sflag [#allocation4], %s84
          %s86 = sand.u32 %s20, 1
          %s87 = smul.addr %s86, 64
          %s88 = scalar_lea.vmem [#allocation3], %s87
          %s89 = smul.u32 4, %s10
          %s91 = ssub.s32 1024, 1024
          %92 = vsyncadd %s85, %s91
          %s93 = smul.addr %s89, 2
          %s94 = smul.addr %s93, 128
          %s95 = scalar_lea.hbm %s0, %s94
          %s96 = sshll.u32 %s88, 4
          %s97 = int_to_ptr.vmem [resolvable:$true] %s96
          %102 = dma.hbm_to_vmem [thread:$0]  %s95, 1024, %s97, %s85, 128, 128, 8
        $region20: #{tpu_custom_call.1} parent=15 // pred_fallthru
          _
      $region16: #{tpu_custom_call.1} parent=5 // pred_fallthru
        _
      %p103 = scmp.le.s32.totalorder 1, %s10
      %p104 = scmp.lt.s32.totalorder %s10, 3
      %p105 = pnand %p103, %p104
      %p106 = pneg %p105
      // Predicated region
      $region21: #{tpu_custom_call.1} parent=5 // pred_check
        _
      $region22: #{tpu_custom_call.1} parent=5 // pred_check_branch
        %108 = sbr.rel (%p105) target = $region24
      $region23: #{tpu_custom_call.1} parent=5 // pred_region
        %s109 = ssub.s32 %s10, 1
        %s110 = sand.u32 %s23, 1
        %s111 = scalar_lea.sflag [#allocation4], %s110
        %s112 = sand.u32 %s23, 1
        %s113 = smul.addr %s112, 64
        %s114 = scalar_lea.vmem [#allocation3], %s113
        // Predicated region
        $region25: #{tpu_custom_call.1} parent=23 // pred_check
          %p115 = pneg %p36
        $region26: #{tpu_custom_call.1} parent=23 // pred_check_branch
          %117 = sbr.rel (%p115) target = $region28
        $region27: #{tpu_custom_call.1} parent=23 // pred_region
          %118 = dma.done %s111, 1024
        $region28: #{tpu_custom_call.1} parent=23 // pred_fallthru
          _
        %s119 = sand.u32 %s23, 1
        %s120 = scalar_lea.sflag [#allocation4], %s119
        %s121 = sand.u32 %s23, 1
        %s122 = smul.addr %s121, 64
        %s123 = scalar_lea.vmem [#allocation3], %s122
        %p124 = pneg %p36
        %p125 = pneg %p33
        %p126 = pneg %p62
        %p127 = pneg %p59
        %s128 = smul.u32 4, %s15
        %p129 = scmp.lt.s32.totalorder %s128, 7
        %s130 = scalar_select %p129, %s128, 7
        %s131 = smul.addr %s130, 2
        %s132 = smul.addr %s131, 8
        %s133 = scalar_lea.vmem %s1, %s132
        %s134 = smul.u32 4, %s15
        %s135 = smul.u32 4, %s15
        %p136 = scmp.lt.s32.totalorder %s135, 7
        %s137 = scalar_select %p136, %s135, 7
        %s138 = smul.addr %s137, 2
        %s139 = smul.addr %s138, 8
        %s140 = scalar_lea.vmem %s1, %s139
        %s141 = smul.u32 4, %s15
        %v142 = vld [vmem:[%s114] sm:$0xff]
        %v143 = vld [vmem:[%s114 + $0x8] sm:$0x3f]
        %v144 = vld [vmem:[%s114 + $0x10] sm:$0xff]
        %v145 = vld [vmem:[%s114 + $0x18] sm:$0x3f]
        %v146 = vld [vmem:[%s114 + $0x20] sm:$0xff]
        %v147 = vld [vmem:[%s114 + $0x28] sm:$0x3f]
        %v148 = vld [vmem:[%s114 + $0x30] sm:$0xff]
        %v149 = vld [vmem:[%s114 + $0x38] sm:$0x3f]
        %v150 = vmul.f32 %v142, 0.27406862
        %v151 = vmul.f32 %v143, 0.27406862
        %v152 = vmul.f32 %v144, 0.27406862
        %v153 = vmul.f32 %v145, 0.27406862
        %v154 = vmul.f32 %v146, 0.27406862
        %v155 = vmul.f32 %v147, 0.27406862
        %v156 = vmul.f32 %v148, 0.27406862
        %v157 = vmul.f32 %v149, 0.27406862
        %v158 = vld [vmem:[%s114 + $0x1] sm:$0xff]
        %v159 = vld [vmem:[%s114 + $0x9] sm:$0x3f]
        %v160 = vld [vmem:[%s114 + $0x11] sm:$0xff]
        %v161 = vld [vmem:[%s114 + $0x19] sm:$0x3f]
        %v162 = vld [vmem:[%s114 + $0x21] sm:$0xff]
        %v163 = vld [vmem:[%s114 + $0x29] sm:$0x3f]
        %v164 = vld [vmem:[%s114 + $0x31] sm:$0xff]
        %v165 = vld [vmem:[%s114 + $0x39] sm:$0x3f]
        %v166 = vmul.f32 %v158, 0.45186278
        %v167 = vmul.f32 %v159, 0.45186278
        %v168 = vmul.f32 %v160, 0.45186278
        %v169 = vmul.f32 %v161, 0.45186278
        %v170 = vmul.f32 %v162, 0.45186278
        %v171 = vmul.f32 %v163, 0.45186278
        %v172 = vmul.f32 %v164, 0.45186278
        %v173 = vmul.f32 %v165, 0.45186278
        %v174 = vadd.f32 %v150, %v166
        %v175 = vadd.f32 %v151, %v167
        %v176 = vadd.f32 %v152, %v168
        %v177 = vadd.f32 %v153, %v169
        %v178 = vadd.f32 %v154, %v170
        %v179 = vadd.f32 %v155, %v171
        %v180 = vadd.f32 %v156, %v172
        %v181 = vadd.f32 %v157, %v173
        %v182 = vld [vmem:[%s114 + $0x2] sm:$0xff]
        %v183 = vld [vmem:[%s114 + $0xa] sm:$0x3f]
        %v184 = vld [vmem:[%s114 + $0x12] sm:$0xff]
        %v185 = vld [vmem:[%s114 + $0x1a] sm:$0x3f]
        %v186 = vld [vmem:[%s114 + $0x22] sm:$0xff]
        %v187 = vld [vmem:[%s114 + $0x2a] sm:$0x3f]
        %v188 = vld [vmem:[%s114 + $0x32] sm:$0xff]
        %v189 = vld [vmem:[%s114 + $0x3a] sm:$0x3f]
        %v190 = vmul.f32 %v182, 0.27406862
        %v191 = vmul.f32 %v183, 0.27406862
        %v192 = vmul.f32 %v184, 0.27406862
        %v193 = vmul.f32 %v185, 0.27406862
        %v194 = vmul.f32 %v186, 0.27406862
        %v195 = vmul.f32 %v187, 0.27406862
        %v196 = vmul.f32 %v188, 0.27406862
        %v197 = vmul.f32 %v189, 0.27406862
        %v198 = vadd.f32 %v174, %v190
        %v199 = vadd.f32 %v175, %v191
        %v200 = vadd.f32 %v176, %v192
        %v201 = vadd.f32 %v177, %v193
        %v202 = vadd.f32 %v178, %v194
        %v203 = vadd.f32 %v179, %v195
        %v204 = vadd.f32 %v180, %v196
        %v205 = vadd.f32 %v181, %v197
        %vm206 = vcmask 130048
        %207 = vst.msk [vmem:[#allocation2] sm:$0xff] %vm206, %v198
        %vm208 = vcmask 128000
        %209 = vst.msk [vmem:[#allocation2 + $0x8] sm:$0x3f] %vm208, %v199
        %210 = vst.msk [vmem:[#allocation2 + $0x10] sm:$0xff] %vm206, %v200
        %211 = vst.msk [vmem:[#allocation2 + $0x18] sm:$0x3f] %vm208, %v201
        %212 = vst.msk [vmem:[#allocation2 + $0x20] sm:$0xff] %vm206, %v202
        %213 = vst.msk [vmem:[#allocation2 + $0x28] sm:$0x3f] %vm208, %v203
        %214 = vst.msk [vmem:[#allocation2 + $0x30] sm:$0xff] %vm206, %v204
        %215 = vst.msk [vmem:[#allocation2 + $0x38] sm:$0x3f] %vm208, %v205
        %v216 = vld [vmem:[#allocation2] sm:$0xff]
        %v217 = vld [vmem:[#allocation2 + $0x8] sm:$0x3f]
        %v218 = vld [vmem:[#allocation2 + $0x10] sm:$0xff]
        %v219 = vld [vmem:[#allocation2 + $0x18] sm:$0x3f]
        %v220 = vld [vmem:[#allocation2 + $0x20] sm:$0xff]
        %v221 = vld [vmem:[#allocation2 + $0x28] sm:$0x3f]
        %v222 = vld [vmem:[#allocation2 + $0x30] sm:$0xff]
        %v223 = vld [vmem:[#allocation2 + $0x38] sm:$0x3f]
        %v224 = vmul.f32 %v216, 0.27406862
        %v225 = vmul.f32 %v217, 0.27406862
        %v226 = vmul.f32 %v218, 0.27406862
        %v227 = vmul.f32 %v219, 0.27406862
        %v228 = vmul.f32 %v220, 0.27406862
        %v229 = vmul.f32 %v221, 0.27406862
        %v230 = vmul.f32 %v222, 0.27406862
        %v231 = vmul.f32 %v223, 0.27406862
        %v232 = vmul.f32 %v216, 0.45186278
        %v233 = vmul.f32 %v217, 0.45186278
        %v234 = vmul.f32 %v218, 0.45186278
        %v235 = vmul.f32 %v219, 0.45186278
        %v236 = vmul.f32 %v220, 0.45186278
        %v237 = vmul.f32 %v221, 0.45186278
        %v238 = vmul.f32 %v222, 0.45186278
        %v239 = vmul.f32 %v223, 0.45186278
        %248 = vrot.lane.b32.xlu0 %v232, 127
        %v249 = vpop.permute.xlu0 %248
        %250 = vrot.lane.b32.xlu0 %v233, 127
        %v251 = vpop.permute.xlu0 %250
        %252 = vrot.lane.b32.xlu0 %v234, 127
        %v253 = vpop.permute.xlu0 %252
        %254 = vrot.lane.b32.xlu0 %v235, 127
        %v255 = vpop.permute.xlu0 %254
        %256 = vrot.lane.b32.xlu0 %v236, 127
        %v257 = vpop.permute.xlu0 %256
        %258 = vrot.lane.b32.xlu0 %v237, 127
        %v259 = vpop.permute.xlu0 %258
        %260 = vrot.lane.b32.xlu0 %v238, 127
        %v261 = vpop.permute.xlu0 %260
        %262 = vrot.lane.b32.xlu0 %v239, 127
        %v263 = vpop.permute.xlu0 %262
        %v272 = vadd.f32 %v224, %v249
        %v273 = vadd.f32 %v225, %v251
        %v274 = vadd.f32 %v226, %v253
        %v275 = vadd.f32 %v227, %v255
        %v276 = vadd.f32 %v228, %v257
        %v277 = vadd.f32 %v229, %v259
        %v278 = vadd.f32 %v230, %v261
        %v279 = vadd.f32 %v231, %v263
        %288 = vrot.lane.b32.xlu0 %v224, 126
        %v289 = vpop.permute.xlu0 %288
        %290 = vrot.lane.b32.xlu0 %v225, 126
        %v291 = vpop.permute.xlu0 %290
        %292 = vrot.lane.b32.xlu0 %v226, 126
        %v293 = vpop.permute.xlu0 %292
        %294 = vrot.lane.b32.xlu0 %v227, 126
        %v295 = vpop.permute.xlu0 %294
        %296 = vrot.lane.b32.xlu0 %v228, 126
        %v297 = vpop.permute.xlu0 %296
        %298 = vrot.lane.b32.xlu0 %v229, 126
        %v299 = vpop.permute.xlu0 %298
        %300 = vrot.lane.b32.xlu0 %v230, 126
        %v301 = vpop.permute.xlu0 %300
        %302 = vrot.lane.b32.xlu0 %v231, 126
        %v303 = vpop.permute.xlu0 %302
        %v312 = vadd.f32 %v272, %v289
        %v313 = vadd.f32 %v273, %v291
        %v314 = vadd.f32 %v274, %v293
        %v315 = vadd.f32 %v275, %v295
        %v316 = vadd.f32 %v276, %v297
        %v317 = vadd.f32 %v277, %v299
        %v318 = vadd.f32 %v278, %v301
        %v319 = vadd.f32 %v279, %v303
        %vm320 = vcmask 113664
        %321 = vst.msk [vmem:[%s140] sm:$0xff] %vm320, %v312
        %vm322 = vcmask 111616
        %323 = vst.msk [vmem:[%s140 + $0x8] sm:$0x3f] %vm322, %v313
        %324 = vst.msk [vmem:[%s140 + $0x10] sm:$0xff] %vm320, %v314
        %325 = vst.msk [vmem:[%s140 + $0x18] sm:$0x3f] %vm322, %v315
        %326 = vst.msk [vmem:[%s140 + $0x20] sm:$0xff] %vm320, %v316
        %327 = vst.msk [vmem:[%s140 + $0x28] sm:$0x3f] %vm322, %v317
        %328 = vst.msk [vmem:[%s140 + $0x30] sm:$0xff] %vm320, %v318
        %329 = vst.msk [vmem:[%s140 + $0x38] sm:$0x3f] %vm322, %v319
        %s330 = smul.u32 4, %s15
        %p331 = scmp.lt.s32.totalorder %s330, 7
        %s332 = scalar_select %p331, %s330, 7
        %s333 = smul.addr %s332, 2
        %s334 = smul.addr %s333, 8
        %s335 = scalar_lea.vmem %s1, %s334
        // Predicated region
        $region29: #{tpu_custom_call.1} parent=23 // pred_check
          %p336 = pneg %p59
        $region30: #{tpu_custom_call.1} parent=23 // pred_check_branch
          %338 = sbr.rel (%p336) target = $region32
        $region31: #{tpu_custom_call.1} parent=23 // pred_region
          %s339 = smul.u32 4, %s15
        $region32: #{tpu_custom_call.1} parent=23 // pred_fallthru
          _
      $region24: #{tpu_custom_call.1} parent=5 // pred_fallthru
        _
      %p340 = scmp.le.s32.totalorder 2, %s10
      // Predicated region
      $region33: #{tpu_custom_call.1} parent=5 // pred_check
        %p341 = pneg %p340
      $region34: #{tpu_custom_call.1} parent=5 // pred_check_branch
        %343 = sbr.rel (%p341) target = $region36
      $region35: #{tpu_custom_call.1} parent=5 // pred_region
        %s344 = ssub.s32 %s10, 2
        // Predicated region
        $region37: #{tpu_custom_call.1} parent=35 // pred_check
          %p345 = pneg %p65
        $region38: #{tpu_custom_call.1} parent=35 // pred_check_branch
          %347 = sbr.rel (%p345) target = $region40
        $region39: #{tpu_custom_call.1} parent=35 // pred_region
          %s348 = smul.u32 4, %s16
          %p349 = scmp.lt.s32.totalorder %s348, 7
          %s350 = scalar_select %p349, %s348, 7
          %s351 = smul.addr %s350, 2
          %s352 = smul.addr %s351, 8
          %s353 = scalar_lea.vmem %s1, %s352
        $region40: #{tpu_custom_call.1} parent=35 // pred_fallthru
          _
      $region36: #{tpu_custom_call.1} parent=5 // pred_fallthru
        _
    $region6: #{tpu_custom_call.1} parent=1 // loop_footer
      %s14 = sadd.s32 1, %s10
    $region7: #{tpu_custom_call.1} parent=1 // loop_footer_branch
      %9 = sbr.rel target = $region3
    $region8: #{tpu_custom_call.1} parent=1 // loop_exit
      _
    %354 = vsyncpa [#allocation4], 1
    %s355 = scalar_lea.sflag [#allocation4], 1
    %356 = vsyncpa %s355, 1

</llo_original>
